<compile_context>
chip_gen: v6e
topology: v6e:2x2x1
jax: 0.10.0
libtpu: 0.0.40
codegen_flags: <defaults>
</compile_context>

<pallas_src>
import functools

import jax
import jax.numpy as jnp
from jax.experimental import pallas as pl
from jax.experimental.pallas import tpu as pltpu

EPS = 1e-15
PROJ_EPS = 1e-5
LN_EPS = 1e-5
NEG_BIG = -1e30   # finite pad-mask sentinel (avoids inf-inf NaN corner cases)


# ---------------- in-kernel helpers (Poincare ball, c = 1) ----------------
def _artanh(x):
    x = jnp.clip(x, -1.0 + 1e-7, 1.0 - 1e-7)
    return 0.5 * jnp.log((1.0 + x) / (1.0 - x))


def _layernorm(x, g, b):
    # var = E[x^2] - mu^2 : removes the serial mu -> (x-mu)^2 reduction chain.
    mu = jnp.mean(x, axis=-1, keepdims=True)
    ms = jnp.mean(x * x, axis=-1, keepdims=True)
    var = jnp.maximum(ms - mu * mu, 0.0)
    return (x - mu) * jax.lax.rsqrt(var + LN_EPS) * g + b


# ---------------- kernel 1: row-tiled generator path ----------------
def copygen_kernel(hidden_ref, attn_ref, w_ref, hypb_ref, vv_ref,
                   g1_ref, be1_ref, g2_ref, be2_ref, wc_ref, bc_ref,
                   outp_ref, mulattn_ref, *, pad_idx):
    x = hidden_ref[...]                                             # (T, Din)

    # --- MobiusLinear: mob_mat_mul(W, x) ---
    xe = x + EPS
    mx = jnp.dot(xe, w_ref[...], preferred_element_type=jnp.float32)  # (T, Dout)
    xn = jnp.sqrt(jnp.sum(xe * xe, axis=-1, keepdims=True))         # (T, 1)
    art_xn = _artanh(xn)
    mxn = jnp.maximum(jnp.sqrt(jnp.sum(mx * mx, axis=-1, keepdims=True)), EPS)
    # ||tanh(r)/mxn * mx|| == tanh(r)  ->  fold the ball projection analytically
    t = jnp.minimum(jnp.tanh(mxn / xn * art_xn), 1.0 - PROJ_EPS)    # (T, 1)
    wx = (t / mxn) * mx                                             # ||wx|| = t

    # --- mob_add(wx, exp_map_zero(b)); hyp_b (+eps) and ||hyp_b||^2 precomputed ---
    v = hypb_ref[...]                                               # (1, Dout)
    vv = vv_ref[...]                                                # (1, 1)
    uv = jnp.sum(wx * v, axis=-1, keepdims=True)                    # (T, 1)
    uu = t * t
    denom = 1.0 + 2.0 * uv + uu * vv                                # > 0
    h = ((1.0 + 2.0 * uv + vv) * wx + (1.0 - uu) * v) / denom

    # --- logits = LayerNorm_1(log_map_zero(project(h)))  (project fused in) ---
    hn = jnp.sqrt(jnp.sum(h * h, axis=-1, keepdims=True))
    ln_h = _artanh(jnp.minimum(hn, 1.0 - PROJ_EPS)) / jnp.maximum(hn, EPS) * h
    logits = _layernorm(ln_h, g1_ref[...], be1_ref[...])
    col = jax.lax.broadcasted_iota(jnp.int32, logits.shape, 1)
    logits = jnp.where(col == pad_idx, NEG_BIG, logits)

    # softmax over vocab (EUP reciprocal for the denominator)
    m = jnp.max(logits, axis=-1, keepdims=True)
    e = jnp.exp(logits - m)
    prob = e * pl.reciprocal(jnp.sum(e, axis=-1, keepdims=True), approx=True)

    # --- p_copy = sigmoid(linear_copy(LayerNorm_2(log_map_zero(hidden)))) ---
    # log_map_zero(x) = artanh(||xe||)/||xe|| * xe  -> reuse xn / art_xn
    ln2 = _layernorm((art_xn / xn) * xe, g2_ref[...], be2_ref[...])
    pc_logit = jnp.sum(ln2 * wc_ref[...], axis=-1, keepdims=True) + bc_ref[...]
    p_copy = jax.nn.sigmoid(pc_logit)                               # (T, 1)

    outp_ref[...] = prob * (1.0 - p_copy)
    mulattn_ref[...] = attn_ref[...] * p_copy


# ---------------- kernel 2: copy path (per-batch matmul) ----------------
def bmm_concat_kernel(op_ref, a_ref, s_ref, o_ref):
    # op_ref: (Tt, B, Dout)  a_ref: (Tt, B, S)  s_ref: (S, B, V)
    # o_ref : (Tt, B, Dout + V)   -- final output assembled in-kernel (no concat op)
    for b in range(a_ref.shape[1]):
        cp = jnp.dot(a_ref[:, b, :], s_ref[:, b, :],
                     preferred_element_type=jnp.float32)            # (Tt, V)
        o_ref[:, b, :] = jnp.concatenate([op_ref[:, b, :], cp], axis=-1)


def bmm_kernel(a_ref, s_ref, o_ref):
    # a_ref: (Tt, B, S)  s_ref: (S, B, Vt)  o_ref: (Tt, B, Vt)
    for b in range(a_ref.shape[1]):
        o_ref[:, b, :] = jnp.dot(a_ref[:, b, :], s_ref[:, b, :],
                                 preferred_element_type=jnp.float32)


def _vmem_limit(nbytes):
    # generous double-buffer headroom, but never below the v5e default nor
    # above v7x's 64 MiB physical VMEM.
    return int(min(max(2 * nbytes, 32 * 1024 * 1024), 64 * 1024 * 1024))


# ---------------- wrapper ----------------
def copy_generator_hype(hidden, attn, src_map, params, pad_idx,
                        *, force_tiled_copy=False):
    N, d_in = hidden.shape
    N2, slen = attn.shape
    slen2, batch, cvocab = src_map.shape
    assert N == N2 and slen == slen2 and N % batch == 0
    tlen = N // batch
    d_out = params["w"].shape[1]
    d_tot = d_out + cvocab

    hidden = hidden.astype(jnp.float32)
    attn = attn.astype(jnp.float32)
    src_map = src_map.astype(jnp.float32)

    # hyp_b = exp_map_zero(b) + eps and ||hyp_b||^2 are per-call constants:
    # precompute them once here instead of per row tile inside the kernel.
    b_pt = params["b"].astype(jnp.float32) + EPS                    # (1, Dout)
    bn = jnp.sqrt(jnp.sum(b_pt * b_pt, axis=-1, keepdims=True))
    hyp_b = jnp.tanh(bn) / bn * b_pt
    hbn = jnp.maximum(jnp.sqrt(jnp.sum(hyp_b * hyp_b, axis=-1, keepdims=True)), EPS)
    hyp_b = hyp_b * jnp.where(hbn > 1.0 - PROJ_EPS, (1.0 - PROJ_EPS) / hbn, 1.0)
    hyp_b = hyp_b + EPS
    vv = jnp.sum(hyp_b * hyp_b, axis=-1, keepdims=True)             # (1, 1)

    # ---- kernel 1: row-tiled, weights/params resident across the grid ----
    tile_n = N if N <= 256 else 256                                 # mult of 8 / full
    grid1 = (pl.cdiv(N, tile_n),)
    row = lambda w: pl.BlockSpec((tile_n, w), lambda i: (i, 0))
    cst = lambda r, c: pl.BlockSpec((r, c), lambda i: (0, 0))

    k1_bytes = 4 * (d_in * d_out + 6 * max(d_in, d_out) + 4
                    + 2 * 2 * tile_n * (d_in + 2 * slen + d_out))
    k1_cost = pl.CostEstimate(
        flops=int(2 * N * d_in * d_out + 40 * N * (d_in + d_out)),
        transcendentals=int(N * (2 * d_out + d_in + 8)),
        bytes_accessed=int(4 * (N * (d_in + 2 * slen + d_out) + d_in * d_out)))

    out_prob, mul_attn = pl.pallas_call(
        functools.partial(copygen_kernel, pad_idx=pad_idx),
        out_shape=(jax.ShapeDtypeStruct((N, d_out), jnp.float32),
                   jax.ShapeDtypeStruct((N, slen), jnp.float32)),
        grid=grid1,
        in_specs=[row(d_in), row(slen),
                  cst(d_in, d_out), cst(1, d_out), cst(1, 1),
                  cst(1, d_out), cst(1, d_out), cst(1, d_in), cst(1, d_in),
                  cst(1, d_in), cst(1, 1)],
        out_specs=(row(d_out), row(slen)),
        compiler_params=pltpu.CompilerParams(
            dimension_semantics=("parallel",),
            vmem_limit_bytes=_vmem_limit(k1_bytes)),
        cost_estimate=k1_cost,
    )(hidden, attn, params["w"], hyp_b, vv,
      params["ln1_g"], params["ln1_b"], params["ln2_g"], params["ln2_b"],
      params["w_copy"], params["b_copy"])

    # ---- kernel 2: bmm over the batch, layouts expressed via index_maps ----
    attn3 = mul_attn.reshape(tlen, batch, slen)        # free row-major view
    tile_t = tlen if tlen <= 64 else 64
    t_tiles = pl.cdiv(tlen, tile_t)
    smap_bytes = 4 * slen * batch * cvocab

    if not force_tiled_copy and smap_bytes <= (4 << 20):
        # Small extended vocab: keep src_map VMEM-resident and fuse the final
        # concatenate into the kernel (one full-width lane-dense store per row).
        outp3 = out_prob.reshape(tlen, batch, d_out)
        k2_bytes = smap_bytes + 4 * 2 * 2 * tile_t * batch * (d_out + slen + d_tot)
        k2_cost = pl.CostEstimate(
            flops=int(2 * tlen * batch * slen * cvocab),
            transcendentals=0,
            bytes_accessed=int(4 * (tlen * batch * (d_out + slen + d_tot)
                                    + slen * batch * cvocab)))
        out3 = pl.pallas_call(
            bmm_concat_kernel,
            out_shape=jax.ShapeDtypeStruct((tlen, batch, d_tot), jnp.float32),
            grid=(t_tiles,),
            in_specs=[pl.BlockSpec((tile_t, batch, d_out), lambda ti: (ti, 0, 0)),
                      pl.BlockSpec((tile_t, batch, slen), lambda ti: (ti, 0, 0)),
                      pl.BlockSpec((slen, batch, cvocab), lambda ti: (0, 0, 0))],
            out_specs=pl.BlockSpec((tile_t, batch, d_tot), lambda ti: (ti, 0, 0)),
            compiler_params=pltpu.CompilerParams(
                dimension_semantics=("parallel",),
                vmem_limit_bytes=_vmem_limit(k2_bytes)),
            cost_estimate=k2_cost,
        )(outp3, attn3, src_map)
        return out3.reshape(N, d_tot)

    # Large extended vocab: tile the vocab (lane) dimension in 128-multiples so
    # per-step VMEM stays bounded (v7x 64 MiB); src_map is fetched once per
    # vocab tile (outer grid axis), the small attn tiles are re-streamed.
    tile_v = cvocab if cvocab <= 1024 else 1024
    v_tiles = pl.cdiv(cvocab, tile_v)
    k2_bytes = 4 * 2 * (tile_t * batch * slen + slen * batch * tile_v
                        + tile_t * batch * tile_v)
    k2_cost = pl.CostEstimate(
        flops=int(2 * tlen * batch * slen * cvocab),
        transcendentals=0,
        bytes_accessed=int(4 * (v_tiles * tlen * batch * slen
                                + slen * batch * cvocab
                                + tlen * batch * cvocab)))
    copy3 = pl.pallas_call(
        bmm_kernel,
        out_shape=jax.ShapeDtypeStruct((tlen, batch, cvocab), jnp.float32),
        grid=(v_tiles, t_tiles),
        in_specs=[pl.BlockSpec((tile_t, batch, slen), lambda vi, ti: (ti, 0, 0)),
                  pl.BlockSpec((slen, batch, tile_v), lambda vi, ti: (0, 0, vi))],
        out_specs=pl.BlockSpec((tile_t, batch, tile_v), lambda vi, ti: (ti, 0, vi)),
        compiler_params=pltpu.CompilerParams(
            dimension_semantics=("parallel", "parallel"),
            vmem_limit_bytes=_vmem_limit(k2_bytes)),
        cost_estimate=k2_cost,
    )(attn3, src_map)
    # TODO(synk): in the huge-vocab path the final concatenate is still one XLA
    # op (one extra HBM round trip); fusing it needs a column-offset out spec.
    return jnp.concatenate([out_prob, copy3.reshape(N, cvocab)], axis=1)


def init_params(key, input_size, output_size):
    k1, k2, k3 = jax.random.split(key, 3)
    k = (1.0 / input_size) ** 0.5
    return {
        # MobiusLinear: w uniform(-k, k), b zeros
        "w": jax.random.uniform(k1, (input_size, output_size), jnp.float32, -k, k),
        "b": jnp.zeros((1, output_size), jnp.float32),
        # LayerNorms: default ones / zeros
        "ln1_g": jnp.ones((1, output_size), jnp.float32),
        "ln1_b": jnp.zeros((1, output_size), jnp.float32),
        "ln2_g": jnp.ones((1, input_size), jnp.float32),
        "ln2_b": jnp.zeros((1, input_size), jnp.float32),
        # nn.Linear(input_size, 1)
        "w_copy": jax.random.uniform(k2, (1, input_size), jnp.float32, -k, k),
        "b_copy": jax.random.uniform(k3, (1, 1), jnp.float32, -k, k),
    }


if __name__ == "__main__":
    key = jax.random.PRNGKey(0)
    kp, kh, ka, ks = jax.random.split(key, 4)

    input_size, output_size = 32, 32
    batch, tlen, slen, cvocab = 2, 4, 8, 16
    pad_idx = 1
    N = batch * tlen

    params = init_params(kp, input_size, output_size)

    # hidden points must lie inside the Poincare ball (||h|| < 1)
    hv = jax.random.normal(kh, (N, input_size), jnp.float32)
    hidden = hv * (0.7 / (1.0 + jnp.linalg.norm(hv, axis=-1, keepdims=True)))

    attn = jax.nn.softmax(jax.random.normal(ka, (N, slen), jnp.float32), axis=-1)

    idx = jax.random.randint(ks, (slen, batch), 0, cvocab)
    src_map = jax.nn.one_hot(idx, cvocab, dtype=jnp.float32)   # (slen, batch, cvocab)

    out_fused = jax.block_until_ready(
        copy_generator_hype(hidden, attn, src_map, params, pad_idx))
    out_tiled = jax.block_until_ready(
        copy_generator_hype(hidden, attn, src_map, params, pad_idx,
                            force_tiled_copy=True))

    assert out_fused.shape == (N, output_size + cvocab), out_fused.shape
    assert bool(jnp.all(jnp.isfinite(out_fused)))
    assert bool(jnp.allclose(out_fused, out_tiled, atol=1e-5, rtol=1e-5))
    print("KERNEL_OK")
</pallas_src>

<mosaic_0001>
module attributes {stable_mosaic.version = 11 : i64} {
  func.func @copygen_kernel(%arg0: i32, %arg1: memref<8x32xf32, #tpu.memory_space<vmem>>, %arg2: memref<8x8xf32, #tpu.memory_space<vmem>>, %arg3: memref<32x32xf32, #tpu.memory_space<vmem>>, %arg4: memref<1x32xf32, #tpu.memory_space<vmem>>, %arg5: memref<1x1xf32, #tpu.memory_space<vmem>>, %arg6: memref<1x32xf32, #tpu.memory_space<vmem>>, %arg7: memref<1x32xf32, #tpu.memory_space<vmem>>, %arg8: memref<1x32xf32, #tpu.memory_space<vmem>>, %arg9: memref<1x32xf32, #tpu.memory_space<vmem>>, %arg10: memref<1x32xf32, #tpu.memory_space<vmem>>, %arg11: memref<1x1xf32, #tpu.memory_space<vmem>>, %arg12: memref<8x32xf32, #tpu.memory_space<vmem>>, %arg13: memref<8x8xf32, #tpu.memory_space<vmem>>) attributes {dimension_semantics = [#tpu.dimension_semantics<parallel>], iteration_bounds = array<i64: 1>, scalar_prefetch = 0 : i64, scratch_operands = 0 : i64, tpu.core_type = #tpu.core_type<tc>, window_params = [{transform_indices = @transform_0, window_bounds = array<i64: 8, 32>}, {transform_indices = @transform_1, window_bounds = array<i64: 8, 8>}, {pipeline_mode = #tpu.pipeline_mode<synchronous>, transform_indices = @transform_2, window_bounds = array<i64: 32, 32>}, {pipeline_mode = #tpu.pipeline_mode<synchronous>, transform_indices = @transform_3, window_bounds = array<i64: 1, 32>}, {pipeline_mode = #tpu.pipeline_mode<synchronous>, transform_indices = @transform_4, window_bounds = array<i64: 1, 1>}, {pipeline_mode = #tpu.pipeline_mode<synchronous>, transform_indices = @transform_5, window_bounds = array<i64: 1, 32>}, {pipeline_mode = #tpu.pipeline_mode<synchronous>, transform_indices = @transform_6, window_bounds = array<i64: 1, 32>}, {pipeline_mode = #tpu.pipeline_mode<synchronous>, transform_indices = @transform_7, window_bounds = array<i64: 1, 32>}, {pipeline_mode = #tpu.pipeline_mode<synchronous>, transform_indices = @transform_8, window_bounds = array<i64: 1, 32>}, {pipeline_mode = #tpu.pipeline_mode<synchronous>, transform_indices = @transform_9, window_bounds = array<i64: 1, 32>}, {pipeline_mode = #tpu.pipeline_mode<synchronous>, transform_indices = @transform_10, window_bounds = array<i64: 1, 1>}, {transform_indices = @transform_11, window_bounds = array<i64: 8, 32>}, {transform_indices = @transform_12, window_bounds = array<i64: 8, 8>}]} {
    %c0 = arith.constant 0 : index
    %c0_0 = arith.constant 0 : index
    %0 = vector.load %arg1[%c0, %c0_0] : memref<8x32xf32, #tpu.memory_space<vmem>>, vector<8x32xf32>
    %cst = arith.constant 1.000000e-15 : f32
    %1 = vector.broadcast %cst : f32 to vector<8x32xf32>
    %2 = arith.addf %0, %1 : vector<8x32xf32>
    %c0_1 = arith.constant 0 : index
    %c0_2 = arith.constant 0 : index
    %3 = vector.load %arg3[%c0_1, %c0_2] : memref<32x32xf32, #tpu.memory_space<vmem>>, vector<32x32xf32>
    %cst_3 = arith.constant dense<0.000000e+00> : vector<8x32xf32>
    %4 = tpu.matmul %2, %3, %cst_3 {dimension_numbers = #tpu.dot_dimension_numbers<[1], [0], [0], [1], [0, 0, 1, 1], [], []>} : vector<8x32xf32>, vector<32x32xf32>, vector<8x32xf32> -> vector<8x32xf32>
    %5 = arith.mulf %2, %2 : vector<8x32xf32>
    %cst_4 = arith.constant dense<0.000000e+00> : vector<8xf32>
    %6 = vector.multi_reduction <add>, %5, %cst_4 [1] : vector<8x32xf32> to vector<8xf32>
    %7 = vector.shape_cast %6 : vector<8xf32> to vector<8x1xf32>
    %8 = math.sqrt %7 : vector<8x1xf32>
    %cst_5 = arith.constant -0.99999988 : f32
    %cst_6 = arith.constant 0.99999988 : f32
    %9 = vector.broadcast %cst_5 : f32 to vector<8x1xf32>
    %10 = arith.maximumf %9, %8 : vector<8x1xf32>
    %11 = vector.broadcast %cst_6 : f32 to vector<8x1xf32>
    %12 = arith.minimumf %11, %10 : vector<8x1xf32>
    %cst_7 = arith.constant 1.000000e+00 : f32
    %13 = vector.broadcast %cst_7 : f32 to vector<8x1xf32>
    %14 = arith.addf %13, %12 : vector<8x1xf32>
    %cst_8 = arith.constant 1.000000e+00 : f32
    %15 = vector.broadcast %cst_8 : f32 to vector<8x1xf32>
    %16 = arith.subf %15, %12 : vector<8x1xf32>
    %17 = arith.divf %14, %16 : vector<8x1xf32>
    %18 = math.log %17 : vector<8x1xf32>
    %cst_9 = arith.constant 5.000000e-01 : f32
    %19 = vector.broadcast %cst_9 : f32 to vector<8x1xf32>
    %20 = arith.mulf %19, %18 : vector<8x1xf32>
    %21 = arith.mulf %4, %4 : vector<8x32xf32>
    %cst_10 = arith.constant dense<0.000000e+00> : vector<8xf32>
    %22 = vector.multi_reduction <add>, %21, %cst_10 [1] : vector<8x32xf32> to vector<8xf32>
    %23 = vector.shape_cast %22 : vector<8xf32> to vector<8x1xf32>
    %24 = math.sqrt %23 : vector<8x1xf32>
    %cst_11 = arith.constant 1.000000e-15 : f32
    %25 = vector.broadcast %cst_11 : f32 to vector<8x1xf32>
    %26 = arith.maximumf %24, %25 : vector<8x1xf32>
    %27 = arith.divf %26, %8 : vector<8x1xf32>
    %28 = arith.mulf %27, %20 : vector<8x1xf32>
    %29 = math.tanh %28 : vector<8x1xf32>
    %cst_12 = arith.constant 0.999989986 : f32
    %30 = vector.broadcast %cst_12 : f32 to vector<8x1xf32>
    %31 = arith.minimumf %29, %30 : vector<8x1xf32>
    %32 = arith.divf %31, %26 : vector<8x1xf32>
    %33 = vector.broadcast %32 : vector<8x1xf32> to vector<8x32xf32>
    %34 = arith.mulf %33, %4 : vector<8x32xf32>
    %c0_13 = arith.constant 0 : index
    %c0_14 = arith.constant 0 : index
    %35 = vector.load %arg4[%c0_13, %c0_14] : memref<1x32xf32, #tpu.memory_space<vmem>>, vector<1x32xf32>
    %c0_15 = arith.constant 0 : index
    %c0_16 = arith.constant 0 : index
    %36 = vector.load %arg5[%c0_15, %c0_16] : memref<1x1xf32, #tpu.memory_space<vmem>>, vector<1x1xf32>
    %37 = vector.broadcast %35 : vector<1x32xf32> to vector<8x32xf32>
    %38 = arith.mulf %34, %37 : vector<8x32xf32>
    %cst_17 = arith.constant dense<0.000000e+00> : vector<8xf32>
    %39 = vector.multi_reduction <add>, %38, %cst_17 [1] : vector<8x32xf32> to vector<8xf32>
    %40 = vector.shape_cast %39 : vector<8xf32> to vector<8x1xf32>
    %41 = arith.mulf %31, %31 : vector<8x1xf32>
    %cst_18 = arith.constant 2.000000e+00 : f32
    %42 = vector.broadcast %cst_18 : f32 to vector<8x1xf32>
    %43 = arith.mulf %42, %40 : vector<8x1xf32>
    %cst_19 = arith.constant 1.000000e+00 : f32
    %44 = vector.broadcast %cst_19 : f32 to vector<8x1xf32>
    %45 = arith.addf %44, %43 : vector<8x1xf32>
    %46 = vector.broadcast %36 : vector<1x1xf32> to vector<8x1xf32>
    %47 = arith.mulf %41, %46 : vector<8x1xf32>
    %48 = arith.addf %45, %47 : vector<8x1xf32>
    %cst_20 = arith.constant 2.000000e+00 : f32
    %49 = vector.broadcast %cst_20 : f32 to vector<8x1xf32>
    %50 = arith.mulf %49, %40 : vector<8x1xf32>
    %cst_21 = arith.constant 1.000000e+00 : f32
    %51 = vector.broadcast %cst_21 : f32 to vector<8x1xf32>
    %52 = arith.addf %51, %50 : vector<8x1xf32>
    %53 = vector.broadcast %36 : vector<1x1xf32> to vector<8x1xf32>
    %54 = arith.addf %52, %53 : vector<8x1xf32>
    %55 = vector.broadcast %54 : vector<8x1xf32> to vector<8x32xf32>
    %56 = arith.mulf %55, %34 : vector<8x32xf32>
    %cst_22 = arith.constant 1.000000e+00 : f32
    %57 = vector.broadcast %cst_22 : f32 to vector<8x1xf32>
    %58 = arith.subf %57, %41 : vector<8x1xf32>
    %59 = vector.broadcast %58 : vector<8x1xf32> to vector<8x32xf32>
    %60 = vector.broadcast %35 : vector<1x32xf32> to vector<8x32xf32>
    %61 = arith.mulf %59, %60 : vector<8x32xf32>
    %62 = arith.addf %56, %61 : vector<8x32xf32>
    %63 = vector.broadcast %48 : vector<8x1xf32> to vector<8x32xf32>
    %64 = arith.divf %62, %63 : vector<8x32xf32>
    %65 = arith.mulf %64, %64 : vector<8x32xf32>
    %cst_23 = arith.constant dense<0.000000e+00> : vector<8xf32>
    %66 = vector.multi_reduction <add>, %65, %cst_23 [1] : vector<8x32xf32> to vector<8xf32>
    %67 = vector.shape_cast %66 : vector<8xf32> to vector<8x1xf32>
    %68 = math.sqrt %67 : vector<8x1xf32>
    %cst_24 = arith.constant 0.999989986 : f32
    %69 = vector.broadcast %cst_24 : f32 to vector<8x1xf32>
    %70 = arith.minimumf %68, %69 : vector<8x1xf32>
    %cst_25 = arith.constant -0.99999988 : f32
    %cst_26 = arith.constant 0.99999988 : f32
    %71 = vector.broadcast %cst_25 : f32 to vector<8x1xf32>
    %72 = arith.maximumf %71, %70 : vector<8x1xf32>
    %73 = vector.broadcast %cst_26 : f32 to vector<8x1xf32>
    %74 = arith.minimumf %73, %72 : vector<8x1xf32>
    %cst_27 = arith.constant 1.000000e+00 : f32
    %75 = vector.broadcast %cst_27 : f32 to vector<8x1xf32>
    %76 = arith.addf %75, %74 : vector<8x1xf32>
    %cst_28 = arith.constant 1.000000e+00 : f32
    %77 = vector.broadcast %cst_28 : f32 to vector<8x1xf32>
    %78 = arith.subf %77, %74 : vector<8x1xf32>
    %79 = arith.divf %76, %78 : vector<8x1xf32>
    %80 = math.log %79 : vector<8x1xf32>
    %cst_29 = arith.constant 5.000000e-01 : f32
    %81 = vector.broadcast %cst_29 : f32 to vector<8x1xf32>
    %82 = arith.mulf %81, %80 : vector<8x1xf32>
    %cst_30 = arith.constant 1.000000e-15 : f32
    %83 = vector.broadcast %cst_30 : f32 to vector<8x1xf32>
    %84 = arith.maximumf %68, %83 : vector<8x1xf32>
    %85 = arith.divf %82, %84 : vector<8x1xf32>
    %86 = vector.broadcast %85 : vector<8x1xf32> to vector<8x32xf32>
    %87 = arith.mulf %86, %64 : vector<8x32xf32>
    %c0_31 = arith.constant 0 : index
    %c0_32 = arith.constant 0 : index
    %88 = vector.load %arg6[%c0_31, %c0_32] : memref<1x32xf32, #tpu.memory_space<vmem>>, vector<1x32xf32>
    %c0_33 = arith.constant 0 : index
    %c0_34 = arith.constant 0 : index
    %89 = vector.load %arg7[%c0_33, %c0_34] : memref<1x32xf32, #tpu.memory_space<vmem>>, vector<1x32xf32>
    %cst_35 = arith.constant dense<0.000000e+00> : vector<8xf32>
    %90 = vector.multi_reduction <add>, %87, %cst_35 [1] : vector<8x32xf32> to vector<8xf32>
    %91 = vector.shape_cast %90 : vector<8xf32> to vector<8x1xf32>
    %cst_36 = arith.constant 3.200000e+01 : f32
    %92 = vector.broadcast %cst_36 : f32 to vector<8x1xf32>
    %93 = arith.divf %91, %92 : vector<8x1xf32>
    %94 = arith.mulf %87, %87 : vector<8x32xf32>
    %cst_37 = arith.constant dense<0.000000e+00> : vector<8xf32>
    %95 = vector.multi_reduction <add>, %94, %cst_37 [1] : vector<8x32xf32> to vector<8xf32>
    %96 = vector.shape_cast %95 : vector<8xf32> to vector<8x1xf32>
    %cst_38 = arith.constant 3.200000e+01 : f32
    %97 = vector.broadcast %cst_38 : f32 to vector<8x1xf32>
    %98 = arith.divf %96, %97 : vector<8x1xf32>
    %99 = arith.mulf %93, %93 : vector<8x1xf32>
    %100 = arith.subf %98, %99 : vector<8x1xf32>
    %cst_39 = arith.constant 0.000000e+00 : f32
    %101 = vector.broadcast %cst_39 : f32 to vector<8x1xf32>
    %102 = arith.maximumf %100, %101 : vector<8x1xf32>
    %103 = vector.broadcast %93 : vector<8x1xf32> to vector<8x32xf32>
    %104 = arith.subf %87, %103 : vector<8x32xf32>
    %cst_40 = arith.constant 9.99999974E-6 : f32
    %105 = vector.broadcast %cst_40 : f32 to vector<8x1xf32>
    %106 = arith.addf %102, %105 : vector<8x1xf32>
    %107 = math.rsqrt %106 : vector<8x1xf32>
    %108 = vector.broadcast %107 : vector<8x1xf32> to vector<8x32xf32>
    %109 = arith.mulf %104, %108 : vector<8x32xf32>
    %110 = vector.broadcast %88 : vector<1x32xf32> to vector<8x32xf32>
    %111 = arith.mulf %109, %110 : vector<8x32xf32>
    %112 = vector.broadcast %89 : vector<1x32xf32> to vector<8x32xf32>
    %113 = arith.addf %111, %112 : vector<8x32xf32>
    %114 = tpu.iota {dimensions = array<i32: 1>} : vector<8x32xi32>
    %c1_i32 = arith.constant 1 : i32
    %115 = vector.broadcast %c1_i32 : i32 to vector<8x32xi32>
    %116 = arith.cmpi eq, %114, %115 : vector<8x32xi32>
    %cst_41 = arith.constant -1.000000e+30 : f32
    %117 = vector.broadcast %cst_41 : f32 to vector<8x32xf32>
    %118 = arith.select %116, %117, %113 : vector<8x32xi1>, vector<8x32xf32>
    %cst_42 = arith.constant dense<0xFF800000> : vector<8xf32>
    %119 = vector.multi_reduction <maximumf>, %118, %cst_42 [1] : vector<8x32xf32> to vector<8xf32>
    %120 = vector.shape_cast %119 : vector<8xf32> to vector<8x1xf32>
    %121 = vector.broadcast %120 : vector<8x1xf32> to vector<8x32xf32>
    %122 = arith.subf %118, %121 : vector<8x32xf32>
    %123 = math.exp %122 : vector<8x32xf32>
    %cst_43 = arith.constant dense<0.000000e+00> : vector<8xf32>
    %124 = vector.multi_reduction <add>, %123, %cst_43 [1] : vector<8x32xf32> to vector<8xf32>
    %125 = vector.shape_cast %124 : vector<8xf32> to vector<8x1xf32>
    %126 = tpu.reciprocal %125 {approx = true} : vector<8x1xf32> -> vector<8x1xf32>
    %127 = vector.broadcast %126 : vector<8x1xf32> to vector<8x32xf32>
    %128 = arith.mulf %123, %127 : vector<8x32xf32>
    %129 = arith.divf %20, %8 : vector<8x1xf32>
    %130 = vector.broadcast %129 : vector<8x1xf32> to vector<8x32xf32>
    %131 = arith.mulf %130, %2 : vector<8x32xf32>
    %c0_44 = arith.constant 0 : index
    %c0_45 = arith.constant 0 : index
    %132 = vector.load %arg8[%c0_44, %c0_45] : memref<1x32xf32, #tpu.memory_space<vmem>>, vector<1x32xf32>
    %c0_46 = arith.constant 0 : index
    %c0_47 = arith.constant 0 : index
    %133 = vector.load %arg9[%c0_46, %c0_47] : memref<1x32xf32, #tpu.memory_space<vmem>>, vector<1x32xf32>
    %cst_48 = arith.constant dense<0.000000e+00> : vector<8xf32>
    %134 = vector.multi_reduction <add>, %131, %cst_48 [1] : vector<8x32xf32> to vector<8xf32>
    %135 = vector.shape_cast %134 : vector<8xf32> to vector<8x1xf32>
    %cst_49 = arith.constant 3.200000e+01 : f32
    %136 = vector.broadcast %cst_49 : f32 to vector<8x1xf32>
    %137 = arith.divf %135, %136 : vector<8x1xf32>
    %138 = arith.mulf %131, %131 : vector<8x32xf32>
    %cst_50 = arith.constant dense<0.000000e+00> : vector<8xf32>
    %139 = vector.multi_reduction <add>, %138, %cst_50 [1] : vector<8x32xf32> to vector<8xf32>
    %140 = vector.shape_cast %139 : vector<8xf32> to vector<8x1xf32>
    %cst_51 = arith.constant 3.200000e+01 : f32
    %141 = vector.broadcast %cst_51 : f32 to vector<8x1xf32>
    %142 = arith.divf %140, %141 : vector<8x1xf32>
    %143 = arith.mulf %137, %137 : vector<8x1xf32>
    %144 = arith.subf %142, %143 : vector<8x1xf32>
    %cst_52 = arith.constant 0.000000e+00 : f32
    %145 = vector.broadcast %cst_52 : f32 to vector<8x1xf32>
    %146 = arith.maximumf %144, %145 : vector<8x1xf32>
    %147 = vector.broadcast %137 : vector<8x1xf32> to vector<8x32xf32>
    %148 = arith.subf %131, %147 : vector<8x32xf32>
    %cst_53 = arith.constant 9.99999974E-6 : f32
    %149 = vector.broadcast %cst_53 : f32 to vector<8x1xf32>
    %150 = arith.addf %146, %149 : vector<8x1xf32>
    %151 = math.rsqrt %150 : vector<8x1xf32>
    %152 = vector.broadcast %151 : vector<8x1xf32> to vector<8x32xf32>
    %153 = arith.mulf %148, %152 : vector<8x32xf32>
    %154 = vector.broadcast %132 : vector<1x32xf32> to vector<8x32xf32>
    %155 = arith.mulf %153, %154 : vector<8x32xf32>
    %156 = vector.broadcast %133 : vector<1x32xf32> to vector<8x32xf32>
    %157 = arith.addf %155, %156 : vector<8x32xf32>
    %c0_54 = arith.constant 0 : index
    %c0_55 = arith.constant 0 : index
    %158 = vector.load %arg10[%c0_54, %c0_55] : memref<1x32xf32, #tpu.memory_space<vmem>>, vector<1x32xf32>
    %159 = vector.broadcast %158 : vector<1x32xf32> to vector<8x32xf32>
    %160 = arith.mulf %157, %159 : vector<8x32xf32>
    %cst_56 = arith.constant dense<0.000000e+00> : vector<8xf32>
    %161 = vector.multi_reduction <add>, %160, %cst_56 [1] : vector<8x32xf32> to vector<8xf32>
    %162 = vector.shape_cast %161 : vector<8xf32> to vector<8x1xf32>
    %c0_57 = arith.constant 0 : index
    %c0_58 = arith.constant 0 : index
    %163 = vector.load %arg11[%c0_57, %c0_58] : memref<1x1xf32, #tpu.memory_space<vmem>>, vector<1x1xf32>
    %164 = vector.broadcast %163 : vector<1x1xf32> to vector<8x1xf32>
    %165 = arith.addf %162, %164 : vector<8x1xf32>
    %166 = arith.negf %165 : vector<8x1xf32>
    %167 = math.exp %166 : vector<8x1xf32>
    %cst_59 = arith.constant 1.000000e+00 : f32
    %168 = vector.broadcast %cst_59 : f32 to vector<8x1xf32>
    %169 = arith.addf %168, %167 : vector<8x1xf32>
    %170 = arith.divf %168, %169 : vector<8x1xf32>
    %cst_60 = arith.constant 1.000000e+00 : f32
    %171 = vector.broadcast %cst_60 : f32 to vector<8x1xf32>
    %172 = arith.subf %171, %170 : vector<8x1xf32>
    %173 = vector.broadcast %172 : vector<8x1xf32> to vector<8x32xf32>
    %174 = arith.mulf %128, %173 : vector<8x32xf32>
    %c0_61 = arith.constant 0 : index
    %c0_62 = arith.constant 0 : index
    %175 = vector.load %arg12[%c0_61, %c0_62] : memref<8x32xf32, #tpu.memory_space<vmem>>, vector<8x32xf32>
    tpu.vector_store %arg12[%c0_61, %c0_62], %174 {strides = array<i32>} : memref<8x32xf32, #tpu.memory_space<vmem>>, vector<8x32xf32>,
    %c0_63 = arith.constant 0 : index
    %c0_64 = arith.constant 0 : index
    %176 = vector.load %arg2[%c0_63, %c0_64] : memref<8x8xf32, #tpu.memory_space<vmem>>, vector<8x8xf32>
    %177 = vector.broadcast %170 : vector<8x1xf32> to vector<8x8xf32>
    %178 = arith.mulf %176, %177 : vector<8x8xf32>
    %c0_65 = arith.constant 0 : index
    %c0_66 = arith.constant 0 : index
    %179 = vector.load %arg13[%c0_65, %c0_66] : memref<8x8xf32, #tpu.memory_space<vmem>>, vector<8x8xf32>
    tpu.vector_store %arg13[%c0_65, %c0_66], %178 {strides = array<i32>} : memref<8x8xf32, #tpu.memory_space<vmem>>, vector<8x8xf32>,
    return
  }
  func.func @transform_0(%arg0: i32) -> (i32, i32) {
    %c0_i32 = arith.constant 0 : i32
    %c0_i32_0 = arith.constant 0 : i32
    return %arg0, %c0_i32 : i32, i32
  }
  func.func @transform_1(%arg0: i32) -> (i32, i32) {
    %c0_i32 = arith.constant 0 : i32
    %c0_i32_0 = arith.constant 0 : i32
    return %arg0, %c0_i32 : i32, i32
  }
  func.func @transform_2(%arg0: i32) -> (i32, i32) {
    %c0_i32 = arith.constant 0 : i32
    %c0_i32_0 = arith.constant 0 : i32
    %c0_i32_1 = arith.constant 0 : i32
    return %c0_i32, %c0_i32_0 : i32, i32
  }
  func.func @transform_3(%arg0: i32) -> (i32, i32) {
    %c0_i32 = arith.constant 0 : i32
    %c0_i32_0 = arith.constant 0 : i32
    %c0_i32_1 = arith.constant 0 : i32
    return %c0_i32, %c0_i32_0 : i32, i32
  }
  func.func @transform_4(%arg0: i32) -> (i32, i32) {
    %c0_i32 = arith.constant 0 : i32
    %c0_i32_0 = arith.constant 0 : i32
    %c0_i32_1 = arith.constant 0 : i32
    return %c0_i32, %c0_i32_0 : i32, i32
  }
  func.func @transform_5(%arg0: i32) -> (i32, i32) {
    %c0_i32 = arith.constant 0 : i32
    %c0_i32_0 = arith.constant 0 : i32
    %c0_i32_1 = arith.constant 0 : i32
    return %c0_i32, %c0_i32_0 : i32, i32
  }
  func.func @transform_6(%arg0: i32) -> (i32, i32) {
    %c0_i32 = arith.constant 0 : i32
    %c0_i32_0 = arith.constant 0 : i32
    %c0_i32_1 = arith.constant 0 : i32
    return %c0_i32, %c0_i32_0 : i32, i32
  }
  func.func @transform_7(%arg0: i32) -> (i32, i32) {
    %c0_i32 = arith.constant 0 : i32
    %c0_i32_0 = arith.constant 0 : i32
    %c0_i32_1 = arith.constant 0 : i32
    return %c0_i32, %c0_i32_0 : i32, i32
  }
  func.func @transform_8(%arg0: i32) -> (i32, i32) {
    %c0_i32 = arith.constant 0 : i32
    %c0_i32_0 = arith.constant 0 : i32
    %c0_i32_1 = arith.constant 0 : i32
    return %c0_i32, %c0_i32_0 : i32, i32
  }
  func.func @transform_9(%arg0: i32) -> (i32, i32) {
    %c0_i32 = arith.constant 0 : i32
    %c0_i32_0 = arith.constant 0 : i32
    %c0_i32_1 = arith.constant 0 : i32
    return %c0_i32, %c0_i32_0 : i32, i32
  }
  func.func @transform_10(%arg0: i32) -> (i32, i32) {
    %c0_i32 = arith.constant 0 : i32
    %c0_i32_0 = arith.constant 0 : i32
    %c0_i32_1 = arith.constant 0 : i32
    return %c0_i32, %c0_i32_0 : i32, i32
  }
  func.func @transform_11(%arg0: i32) -> (i32, i32) {
    %c0_i32 = arith.constant 0 : i32
    %c0_i32_0 = arith.constant 0 : i32
    return %arg0, %c0_i32 : i32, i32
  }
  func.func @transform_12(%arg0: i32) -> (i32, i32) {
    %c0_i32 = arith.constant 0 : i32
    %c0_i32_0 = arith.constant 0 : i32
    return %arg0, %c0_i32 : i32, i32
  }
}

</mosaic_0001>

<llo_original>
// kernel: tpu_custom_call.1
$region0: #{tpu_custom_call.1}
  #allocation0 [shape = 'u32[]', space=smem, size = 0x4, offset = 0x4, fixed_abs, tag = 'smem constant byte address 0x4 - core index']
  #allocation1 [shape = 'u32[144,128]{1,0:T(1,128)}', space=vmem, size = 0x12000, scoped, tag = 'internal scratch']
  #allocation2 [shape = 'f32[1,1]{1,0:T(1,128)S(1)}', space=vmem, size = 0x200, scoped, tag = 'scoped memory for tpu_custom_call.1']
  #allocation3 [shape = 'f32[1,1]{1,0:T(1,128)S(1)}', space=vmem, size = 0x200, scoped, tag = 'scoped memory for tpu_custom_call.1']
  %s0 = inlined_call_operand.hbm [shape: f32[8,32], index: 0, kind: input, shape index: {}]
  %s1 = inlined_call_operand.hbm [shape: f32[8,8], index: 1, kind: input, shape index: {}]
  %s2 = inlined_call_operand.hbm [shape: f32[32,32], index: 2, kind: input, shape index: {}]
  %s3 = inlined_call_operand.vmem [shape: f32[1,32], index: 3, kind: input, shape index: {}]
  %s4 = inlined_call_operand.<no memory space> [shape: f32[1,1], index: 4, kind: input, shape index: {}]
  %s5 = inlined_call_operand.vmem [shape: f32[1,32], index: 5, kind: input, shape index: {}]
  %s6 = inlined_call_operand.vmem [shape: f32[1,32], index: 6, kind: input, shape index: {}]
  %s7 = inlined_call_operand.vmem [shape: f32[1,32], index: 7, kind: input, shape index: {}]
  %s8 = inlined_call_operand.vmem [shape: f32[1,32], index: 8, kind: input, shape index: {}]
  %s9 = inlined_call_operand.vmem [shape: f32[1,32], index: 9, kind: input, shape index: {}]
  %s10 = inlined_call_operand.<no memory space> [shape: f32[1,1], index: 10, kind: input, shape index: {}]
  %s11 = inlined_call_operand.hbm [shape: f32[8,32], index: 11, kind: output, shape index: {0}]
  %s12 = inlined_call_operand.hbm [shape: f32[8,8], index: 12, kind: output, shape index: {1}]
  %13 = xla_tuple %s11, %s12
  %s14 = sld [smem:[#allocation0]]
  $region74: #{tpu_custom_call.1} parent=0
    _
  %s16 = ssub.s32 1, %s14
  %s17 = scalar_select 0, %s16, %s14
  %v18 = vstv %s4
  %19 = vst [vmem:[#allocation2] sm:$0x1] %v18
  %v20 = vstv %s10
  %21 = vst [vmem:[#allocation3] sm:$0x1] %v20
  $region1: #{tpu_custom_call.1} parent=0
    #allocation4 [shape = 'u8[4096]{0}', space=vmem, size = 0x1000, scoped, tag = 'input window, operand 0, single buffered']
    #allocation5 [shape = 's32[1]{0}', space=sflag, size = 0x4, scoped, tag = 'scoped memory for tpu_custom_call.1']
    #allocation6 [shape = 's32[1]{0}', space=sflag, size = 0x4, scoped, tag = 'scoped memory for tpu_custom_call.1']
    #allocation7 [shape = 'u8[4096]{0}', space=vmem, size = 0x1000, scoped, tag = 'input window, operand 1, single buffered']
    #allocation8 [shape = 's32[1]{0}', space=sflag, size = 0x4, scoped, tag = 'scoped memory for tpu_custom_call.1']
    #allocation9 [shape = 'u8[16384]{0}', space=vmem, size = 0x4000, scoped, tag = 'input window, operand 2, single buffered']
    #allocation10 [shape = 'u8[4096]{0}', space=vmem, size = 0x1000, scoped, tag = 'output window, operand 0, single buffered']
    #allocation11 [shape = 'u8[4096]{0}', space=vmem, size = 0x1000, scoped, tag = 'output window, operand 1, single buffered']
    #allocation12 [shape = 's32[1]{0}', space=sflag, size = 0x4, scoped, tag = 'scoped memory for tpu_custom_call.1']
    %22 = vsyncpa [#allocation5], 0
    %23 = vsyncpa [#allocation8], 0
    %24 = vsyncpa [#allocation6], 0
    %25 = vsyncpa [#allocation12], 0
    // Predicated region
    $region2: #{tpu_custom_call.1} parent=1 // pred_check
      _
    $region3: #{tpu_custom_call.1} parent=1 // pred_check_branch
      %27 = sbr.rel (0) target = $region5
    $region4: #{tpu_custom_call.1} parent=1 // pred_region
      %s29 = ssub.s32 128, 128
      %30 = vsyncadd [#allocation5], %s29
      %s32 = sshll.u32 [#allocation4], 4
      %s33 = int_to_ptr.vmem [resolvable:$true] %s32
      %35 = dma.hbm_to_vmem [thread:$0]  %s0, 128, %s33, [#allocation5]
    $region5: #{tpu_custom_call.1} parent=1 // pred_fallthru
      _
    // Predicated region
    $region6: #{tpu_custom_call.1} parent=1 // pred_check
      _
    $region7: #{tpu_custom_call.1} parent=1 // pred_check_branch
      %37 = sbr.rel (0) target = $region9
    $region8: #{tpu_custom_call.1} parent=1 // pred_region
      %s39 = ssub.s32 128, 128
      %40 = vsyncadd [#allocation8], %s39
      %s42 = sshll.u32 [#allocation7], 4
      %s43 = int_to_ptr.vmem [resolvable:$true] %s42
      %45 = dma.hbm_to_vmem [thread:$0]  %s1, 128, %s43, [#allocation8]
    $region9: #{tpu_custom_call.1} parent=1 // pred_fallthru
      _
    // Predicated region
    $region10: #{tpu_custom_call.1} parent=1 // pred_check
      _
    $region11: #{tpu_custom_call.1} parent=1 // pred_check_branch
      %47 = sbr.rel (0) target = $region13
    $region12: #{tpu_custom_call.1} parent=1 // pred_region
      %s49 = ssub.s32 512, 512
      %50 = vsyncadd [#allocation8], %s49
      %s51 = sshll.u32 [#allocation9], 4
      %s52 = int_to_ptr.vmem [resolvable:$true] %s51
      %57 = dma.hbm_to_vmem [thread:$0]  %s2, 512, %s52, [#allocation8], 128, 128, 8
    $region13: #{tpu_custom_call.1} parent=1 // pred_fallthru
      _
    // Predicated region
    $region14: #{tpu_custom_call.1} parent=1 // pred_check
      _
    $region15: #{tpu_custom_call.1} parent=1 // pred_check_branch
      %59 = sbr.rel (0) target = $region17
    $region16: #{tpu_custom_call.1} parent=1 // pred_region
      _
    $region17: #{tpu_custom_call.1} parent=1 // pred_fallthru
      _
    // Predicated region
    $region18: #{tpu_custom_call.1} parent=1 // pred_check
      _
    $region19: #{tpu_custom_call.1} parent=1 // pred_check_branch
      %61 = sbr.rel (0) target = $region21
    $region20: #{tpu_custom_call.1} parent=1 // pred_region
      _
    $region21: #{tpu_custom_call.1} parent=1 // pred_fallthru
      _
    // Predicated region
    $region22: #{tpu_custom_call.1} parent=1 // pred_check
      _
    $region23: #{tpu_custom_call.1} parent=1 // pred_check_branch
      %63 = sbr.rel (0) target = $region25
    $region24: #{tpu_custom_call.1} parent=1 // pred_region
      _
    $region25: #{tpu_custom_call.1} parent=1 // pred_fallthru
      _
    // Predicated region
    $region26: #{tpu_custom_call.1} parent=1 // pred_check
      _
    $region27: #{tpu_custom_call.1} parent=1 // pred_check_branch
      %65 = sbr.rel (0) target = $region29
    $region28: #{tpu_custom_call.1} parent=1 // pred_region
      _
    $region29: #{tpu_custom_call.1} parent=1 // pred_fallthru
      _
    // Predicated region
    $region30: #{tpu_custom_call.1} parent=1 // pred_check
      _
    $region31: #{tpu_custom_call.1} parent=1 // pred_check_branch
      %67 = sbr.rel (0) target = $region33
    $region32: #{tpu_custom_call.1} parent=1 // pred_region
      _
    $region33: #{tpu_custom_call.1} parent=1 // pred_fallthru
      _
    // Predicated region
    $region34: #{tpu_custom_call.1} parent=1 // pred_check
      _
    $region35: #{tpu_custom_call.1} parent=1 // pred_check_branch
      %69 = sbr.rel (0) target = $region37
    $region36: #{tpu_custom_call.1} parent=1 // pred_region
      _
    $region37: #{tpu_custom_call.1} parent=1 // pred_fallthru
      _
    // Predicated region
    $region38: #{tpu_custom_call.1} parent=1 // pred_check
      _
    $region39: #{tpu_custom_call.1} parent=1 // pred_check_branch
      %71 = sbr.rel (0) target = $region41
    $region40: #{tpu_custom_call.1} parent=1 // pred_region
      _
    $region41: #{tpu_custom_call.1} parent=1 // pred_fallthru
      _
    // Predicated region
    $region42: #{tpu_custom_call.1} parent=1 // pred_check
      _
    $region43: #{tpu_custom_call.1} parent=1 // pred_check_branch
      %73 = sbr.rel (0) target = $region45
    $region44: #{tpu_custom_call.1} parent=1 // pred_region
      _
    $region45: #{tpu_custom_call.1} parent=1 // pred_fallthru
      _
    // Predicated region
    $region46: #{tpu_custom_call.1} parent=1 // pred_check
      _
    $region47: #{tpu_custom_call.1} parent=1 // pred_check_branch
      %75 = sbr.rel (0) target = $region49
    $region48: #{tpu_custom_call.1} parent=1 // pred_region
      %76 = dma.done [#allocation5], 128
    $region49: #{tpu_custom_call.1} parent=1 // pred_fallthru
      _
    // Predicated region
    $region50: #{tpu_custom_call.1} parent=1 // pred_check
      _
    $region51: #{tpu_custom_call.1} parent=1 // pred_check_branch
      %78 = sbr.rel (0) target = $region53
    $region52: #{tpu_custom_call.1} parent=1 // pred_region
      %79 = dma.done [#allocation8], 128
    $region53: #{tpu_custom_call.1} parent=1 // pred_fallthru
      _
    // Predicated region
    $region54: #{tpu_custom_call.1} parent=1 // pred_check
      _
    $region55: #{tpu_custom_call.1} parent=1 // pred_check_branch
      %81 = sbr.rel (0) target = $region57
    $region56: #{tpu_custom_call.1} parent=1 // pred_region
      %82 = dma.done [#allocation8], 512
    $region57: #{tpu_custom_call.1} parent=1 // pred_fallthru
      _
    %v83 = vld [vmem:[#allocation4] sm:$0xff]
    %v84 = vadd.f32 %v83, 1e-15
    %v85 = vld [vmem:[#allocation9] sm:$0xff]
    %v86 = vld [vmem:[#allocation9 + $0x8] sm:$0xff]
    %v87 = vld [vmem:[#allocation9 + $0x10] sm:$0xff]
    %v88 = vld [vmem:[#allocation9 + $0x18] sm:$0xff]
    %vm89 = vcmask 261120
    %v91 = vsel %vm89, %v84, 0
    %93 = vmatprep.subr.mxu0 0.0
    %94 = vmatpush1.msra.mxu0 0.0
    %95 = vmatprep.subr.mxu0 0.0
    %96 = vmatpush1.msra.mxu0 0.0
    %97 = vmatprep.subr.mxu0 0.0
    %98 = vmatpush1.msra.mxu0 0.0
    %99 = vmatprep.subr.mxu0 0.0
    %100 = vmatpush1.msra.mxu0 0.0
    %101 = vmatprep.subr.mxu0 0.0
    %102 = vmatpush1.msra.mxu0 0.0
    %103 = vmatprep.subr.mxu0 0.0
    %104 = vmatpush1.msra.mxu0 0.0
    %105 = vmatprep.subr.mxu0 0.0
    %106 = vmatpush1.msra.mxu0 0.0
    %107 = vmatprep.subr.mxu0 0.0
    %108 = vmatpush1.msra.mxu0 0.0
    %109 = vmatprep.subr.mxu0 0.0
    %110 = vmatpush1.msra.mxu0 0.0
    %111 = vmatprep.subr.mxu0 0.0
    %112 = vmatpush1.msra.mxu0 0.0
    %113 = vmatprep.subr.mxu0 0.0
    %114 = vmatpush1.msra.mxu0 0.0
    %115 = vmatprep.subr.mxu0 0.0
    %116 = vmatpush1.msra.mxu0 0.0
    %117 = vmatprep.subr.mxu0 0.0
    %118 = vmatpush1.msra.mxu0 %v88
    %119 = vmatprep.subr.mxu0 0.0
    %120 = vmatpush1.msra.mxu0 %v87
    %121 = vmatprep.subr.mxu0 0.0
    %122 = vmatpush1.msra.mxu0 %v86
    %123 = vmatprep.subr.mxu0 0.0
    %124 = vmatpush1.msra.mxu0 %v85
    %125 = vmatprep.subr.mxu0 0.0
    %126 = vmatpush2.msra.mxu0 0.0
    %127 = vmatprep.subr.mxu0 0.0
    %128 = vmatpush2.msra.mxu0 0.0
    %129 = vmatprep.subr.mxu0 0.0
    %130 = vmatpush2.msra.mxu0 0.0
    %131 = vmatprep.subr.mxu0 0.0
    %132 = vmatpush2.msra.mxu0 0.0
    %133 = vmatprep.subr.mxu0 0.0
    %134 = vmatpush2.msra.mxu0 0.0
    %135 = vmatprep.subr.mxu0 0.0
    %136 = vmatpush2.msra.mxu0 0.0
    %137 = vmatprep.subr.mxu0 0.0
    %138 = vmatpush2.msra.mxu0 0.0
    %139 = vmatprep.subr.mxu0 0.0
    %140 = vmatpush2.msra.mxu0 0.0
    %141 = vmatprep.subr.mxu0 0.0
    %142 = vmatpush2.msra.mxu0 0.0
    %143 = vmatprep.subr.mxu0 0.0
    %144 = vmatpush2.msra.mxu0 0.0
    %145 = vmatprep.subr.mxu0 0.0
    %146 = vmatpush2.msra.mxu0 0.0
    %147 = vmatprep.subr.mxu0 0.0
    %148 = vmatpush2.msra.mxu0 0.0
    %149 = vmatprep.subr.mxu0 0.0
    %150 = vmatpush2.msra.mxu0 0.0
    %151 = vmatprep.subr.mxu0 0.0
    %152 = vmatpush2.msra.mxu0 0.0
    %153 = vmatprep.subr.mxu0 0.0
    %154 = vmatpush2.msra.mxu0 0.0
    %155 = vmatprep.subr.mxu0 0.0
    %156 = vmatpush2.msra.mxu0 0.0
    %157 = vmatprep.mubr.f32.mxu0 0.0
    %158 = vmatmul.mubr.f32.gmra.mxu0 %v91
    %v159 = vpop.f32.mrf.mxu0
    %v160 = vadd.f32 0.0, %v159
    %v161 = vpop.f32.mrf.mxu0
    %162 = vdwg.mxu0
    %v163 = vmul.f32 %v84, %v84
    %v164 = vsel %vm89, %v163, 0.0
    %165 = vadd.xlane.f32.xlu0 %v164
    %v166 = vpop.xlane.xlu0 %165
    %v167 = vrsqrt.pop %v166
    %v168 = vmul.f32 %v166, %v167
    %vm169 = vcmp.eq.f32.partialorder %v166, inf
    %v170 = vsel %vm169, %v166, %v168
    %vm171 = vcmp.eq.f32.partialorder %v166, 0.0
    %v172 = vand.u32 %v166, 2147483648
    %v173 = vsel %vm171, %v172, %v170
    %v174 = vmax.f32 %v173, -0.9999999
    %v175 = vmin.f32 %v174, 0.9999999
    %v176 = vadd.f32 %v175, 1.0
    %v177 = vsub.f32 1.0, %v175
    %v178 = vrcp.pop %v177
    %v179 = vmul.f32 %v176, %v178
    %v180 = vlog2.pop %v179
    %v181 = vmul.f32 %v180, 0.6931472
    %v182 = vmul.f32 %v181, 0.5
    %v183 = vmul.f32 %v160, %v160
    %v184 = vsel %vm89, %v183, 0.0
    %185 = vadd.xlane.f32.xlu0 %v184
    %v186 = vpop.xlane.xlu0 %185
    %v187 = vrsqrt.pop %v186
    %v188 = vmul.f32 %v186, %v187
    %vm189 = vcmp.eq.f32.partialorder %v186, inf
    %v190 = vsel %vm189, %v186, %v188
    %vm191 = vcmp.eq.f32.partialorder %v186, 0.0
    %v192 = vand.u32 %v186, 2147483648
    %v193 = vsel %vm191, %v192, %v190
    %v194 = vmax.f32 %v193, 1e-15
    %v195 = vrcp.pop %v173
    %v196 = vmul.f32 %v194, %v195
    %v197 = vmul.f32 %v196, %v182
    %v198 = vtanh.pop %v197
    %v199 = vmin.f32 %v198, 0.99999
    %v200 = vrcp.pop %v194
    %v201 = vmul.f32 %v199, %v200
    %v202 = vmul.f32 %v201, %v160
    %v203 = vld [vmem:[%s3] sm:$0x1]
    %v204 = vld [vmem:[#allocation2] sm:$0x1]
    %v206 = vlaneseq
    %v207 = vshrl.u32 %v206, 7
    %v208 = vsub.s32 0, %v207
    %v209 = vrot.slane %v203, %v208
    %v211 = vmul.f32 %v202, %v209
    %v212 = vsel %vm89, %v211, 0.0
    %213 = vadd.xlane.f32.xlu0 %v212
    %v214 = vpop.xlane.xlu0 %213
    %v215 = vmul.f32 %v199, %v199
    %v216 = vmul.f32 %v214, 2.0
    %v217 = vadd.f32 %v216, 1.0
    %v219 = vlaneseq
    %v220 = vshrl.u32 %v219, 7
    %v221 = vsub.s32 0, %v220
    %v222 = vrot.slane %v204, %v221
    %v224 = vmul.f32 %v215, %v222
    %v225 = vadd.f32 %v217, %v224
    %v226 = vadd.f32 %v217, %v222
    %228 = vset.pattern.permute.xlu0 0
    %229 = vperm.xlu0 %228, %v226
    %v230 = vpop.permute.xlu0 %229
    %v232 = vmul.f32 %v230, %v202
    %v233 = vsub.f32 1.0, %v215
    %v234 = vmul.f32 %v233, %v209
    %v235 = vadd.f32 %v232, %v234
    %237 = vset.pattern.permute.xlu0 0
    %238 = vperm.xlu0 %237, %v225
    %v239 = vpop.permute.xlu0 %238
    %v241 = vrcp.pop %v239
    %v242 = vmul.f32 %v235, %v241
    %v243 = vmul.f32 %v242, %v242
    %v244 = vsel %vm89, %v243, 0.0
    %245 = vadd.xlane.f32.xlu0 %v244
    %v246 = vpop.xlane.xlu0 %245
    %v247 = vrsqrt.pop %v246
    %v248 = vmul.f32 %v246, %v247
    %vm249 = vcmp.eq.f32.partialorder %v246, inf
    %v250 = vsel %vm249, %v246, %v248
    %vm251 = vcmp.eq.f32.partialorder %v246, 0.0
    %v252 = vand.u32 %v246, 2147483648
    %v253 = vsel %vm251, %v252, %v250
    %v254 = vmin.f32 %v253, 0.99999
    %v255 = vmax.f32 %v254, -0.9999999
    %v256 = vmin.f32 %v255, 0.9999999
    %v257 = vadd.f32 %v256, 1.0
    %v258 = vsub.f32 1.0, %v256
    %v259 = vrcp.pop %v258
    %v260 = vmul.f32 %v257, %v259
    %v261 = vlog2.pop %v260
    %v262 = vmul.f32 %v261, 0.6931472
    %v263 = vmul.f32 %v262, 0.5
    %v264 = vmax.f32 %v253, 1e-15
    %v265 = vrcp.pop %v264
    %v266 = vmul.f32 %v263, %v265
    %v267 = vmul.f32 %v266, %v242
    %v268 = vld [vmem:[%s5] sm:$0x1]
    %v269 = vld [vmem:[%s6] sm:$0x1]
    %v270 = vsel %vm89, %v267, 0.0
    %271 = vadd.xlane.f32.xlu0 %v270
    %v272 = vpop.xlane.xlu0 %271
    %v273 = vrcp.pop 32.0
    %v274 = vmul.f32 %v272, %v273
    %v275 = vmul.f32 %v267, %v267
    %v276 = vsel %vm89, %v275, 0.0
    %277 = vadd.xlane.f32.xlu0 %v276
    %v278 = vpop.xlane.xlu0 %277
    %v279 = vmul.f32 %v278, %v273
    %v280 = vmul.f32 %v274, %v274
    %v281 = vsub.f32 %v279, %v280
    %v282 = vmax.f32 %v281, 0.0
    %v283 = vsub.f32 %v267, %v274
    %v284 = vadd.f32 %v282, 1e-05
    %v285 = vrsqrt.pop %v284
    %v286 = vmul.f32 %v283, %v285
    %v288 = vlaneseq
    %v289 = vshrl.u32 %v288, 7
    %v290 = vsub.s32 0, %v289
    %v291 = vrot.slane %v268, %v290
    %v293 = vmul.f32 %v286, %v291
    %v295 = vlaneseq
    %v296 = vshrl.u32 %v295, 7
    %v297 = vsub.s32 0, %v296
    %v298 = vrot.slane %v269, %v297
    %v300 = vadd.f32 %v293, %v298
    %v301 = vlaneseq
    %v302 = vand.u32 %v301, 127
    %vm303 = vcmp.eq.s32.totalorder %v302, 1
    %v304 = vsel %vm303, -1e+30, %v300
    %v305 = vsel %vm89, %v304, -inf
    %306 = vmax.xlane.f32.xlu0 %v305
    %v307 = vpop.xlane.xlu0 %306
    %v308 = vsub.f32 %v304, %v307
    %v309 = vmul.f32 %v308, 1.442695
    %v310 = vpow.pop %v309
    %v311 = vsel %vm89, %v310, 0.0
    %312 = vadd.xlane.f32.xlu0 %v311
    %v313 = vpop.xlane.xlu0 %312
    %v314 = vrcp.pop %v313
    %v315 = vmul.f32 %v310, %v314
    %v316 = vmul.f32 %v182, %v195
    %v317 = vmul.f32 %v316, %v84
    %v318 = vld [vmem:[%s7] sm:$0x1]
    %v319 = vld [vmem:[%s8] sm:$0x1]
    %v320 = vsel %vm89, %v317, 0.0
    %321 = vadd.xlane.f32.xlu0 %v320
    %v322 = vpop.xlane.xlu0 %321
    %v323 = vmul.f32 %v322, %v273
    %v324 = vmul.f32 %v317, %v317
    %v325 = vsel %vm89, %v324, 0.0
    %326 = vadd.xlane.f32.xlu0 %v325
    %v327 = vpop.xlane.xlu0 %326
    %v328 = vmul.f32 %v327, %v273
    %v329 = vmul.f32 %v323, %v323
    %v330 = vsub.f32 %v328, %v329
    %v331 = vmax.f32 %v330, 0.0
    %v332 = vsub.f32 %v317, %v323
    %v333 = vadd.f32 %v331, 1e-05
    %v334 = vrsqrt.pop %v333
    %v335 = vmul.f32 %v332, %v334
    %v337 = vlaneseq
    %v338 = vshrl.u32 %v337, 7
    %v339 = vsub.s32 0, %v338
    %v340 = vrot.slane %v318, %v339
    %v342 = vmul.f32 %v335, %v340
    %v344 = vlaneseq
    %v345 = vshrl.u32 %v344, 7
    %v346 = vsub.s32 0, %v345
    %v347 = vrot.slane %v319, %v346
    %v349 = vadd.f32 %v342, %v347
    %v350 = vld [vmem:[%s9] sm:$0x1]
    %v352 = vlaneseq
    %v353 = vshrl.u32 %v352, 7
    %v354 = vsub.s32 0, %v353
    %v355 = vrot.slane %v350, %v354
    %v357 = vmul.f32 %v349, %v355
    %v358 = vsel %vm89, %v357, 0.0
    %359 = vadd.xlane.f32.xlu0 %v358
    %v360 = vpop.xlane.xlu0 %359
    %v361 = vld [vmem:[#allocation3] sm:$0x1]
    %v363 = vlaneseq
    %v364 = vshrl.u32 %v363, 7
    %v365 = vsub.s32 0, %v364
    %v366 = vrot.slane %v361, %v365
    %v368 = vadd.f32 %v360, %v366
    %v369 = vxor.u32 %v368, 2147483648
    %v370 = vmul.f32 %v369, 1.442695
    %v371 = vpow.pop %v370
    %v372 = vadd.f32 %v371, 1.0
    %v373 = vrcp.pop %v372
    %v374 = vmul.f32 1.0, %v373
    %v375 = vsub.f32 1.0, %v374
    %377 = vset.pattern.permute.xlu0 0
    %378 = vperm.xlu0 %377, %v375
    %v379 = vpop.permute.xlu0 %378
    %v381 = vmul.f32 %v315, %v379
    %382 = vst.msk [vmem:[#allocation10] sm:$0xff] %vm89, %v381
    %v383 = vld [vmem:[#allocation7] sm:$0xff]
    %385 = vset.pattern.permute.xlu0 0
    %386 = vperm.xlu0 %385, %v374
    %v387 = vpop.permute.xlu0 %386
    %v389 = vmul.f32 %v383, %v387
    %vm390 = vcmask 64512
    %391 = vst.msk [vmem:[#allocation11] sm:$0xff] %vm390, %v389
    // Predicated region
    $region58: #{tpu_custom_call.1} parent=1 // pred_check
      _
    $region59: #{tpu_custom_call.1} parent=1 // pred_check_branch
      %393 = sbr.rel (0) target = $region61
    $region60: #{tpu_custom_call.1} parent=1 // pred_region
      %s395 = ssub.s32 128, 128
      %396 = vsyncadd [#allocation6], %s395
      %s398 = sshll.u32 [#allocation10], 4
      %s399 = int_to_ptr.vmem [resolvable:$true] %s398
      %401 = dma.vmem_to_hbm [thread:$0]  %s399, 128, %s11, [#allocation6]
    $region61: #{tpu_custom_call.1} parent=1 // pred_fallthru
      _
    // Predicated region
    $region62: #{tpu_custom_call.1} parent=1 // pred_check
      _
    $region63: #{tpu_custom_call.1} parent=1 // pred_check_branch
      %403 = sbr.rel (0) target = $region65
    $region64: #{tpu_custom_call.1} parent=1 // pred_region
      %s405 = ssub.s32 128, 128
      %406 = vsyncadd [#allocation12], %s405
      %s408 = sshll.u32 [#allocation11], 4
      %s409 = int_to_ptr.vmem [resolvable:$true] %s408
      %411 = dma.vmem_to_hbm [thread:$0]  %s409, 128, %s12, [#allocation12]
    $region65: #{tpu_custom_call.1} parent=1 // pred_fallthru
      _
    // Predicated region
    $region66: #{tpu_custom_call.1} parent=1 // pred_check
      _
    $region67: #{tpu_custom_call.1} parent=1 // pred_check_branch
      %413 = sbr.rel (0) target = $region69
    $region68: #{tpu_custom_call.1} parent=1 // pred_region
      %414 = dma.done [#allocation6], 128
    $region69: #{tpu_custom_call.1} parent=1 // pred_fallthru
      _
    // Predicated region
    $region70: #{tpu_custom_call.1} parent=1 // pred_check
      _
    $region71: #{tpu_custom_call.1} parent=1 // pred_check_branch
      %416 = sbr.rel (0) target = $region73
    $region72: #{tpu_custom_call.1} parent=1 // pred_region
      %417 = dma.done [#allocation12], 128
    $region73: #{tpu_custom_call.1} parent=1 // pred_fallthru
      _
    %418 = vsyncpa [#allocation5], 1
    %419 = vsyncpa [#allocation8], 1
    %420 = vsyncpa [#allocation6], 1
    %421 = vsyncpa [#allocation12], 1

</llo_original>
